<compile_context>
chip_gen: v6e
topology: v6e:2x2x1
jax: 0.10.0
libtpu: 0.0.40
codegen_flags: <defaults>
</compile_context>

<pallas_src>
import jax
import jax.numpy as jnp
from jax.experimental import pallas as pl
from jax.experimental.pallas import tpu as pltpu


def _round_up(x, m):
    return ((x + m - 1) // m) * m


def _num_tensorcores():
    """2 on dual-TensorCore / megacore chips (v7x, v4, v5p), else 1."""
    try:
        kind = jax.devices()[0].device_kind.lower()
    except Exception:
        return 1
    return 2 if any(t in kind for t in ("v7", "v4", "v5p")) else 1


def linfuse_kernel(data_ref, w_eff_ref, b_eff_ref, w1_ref, b1_ref, out_ref):
    # linear_0 over concat([fuse, data]) with the fuse projection folded in.
    h = (jnp.dot(data_ref[...], w_eff_ref[...],
                 preferred_element_type=jnp.float32) + b_eff_ref[...])
    h = jnp.maximum(h, 0.0)                                   # relu_0 (f32)

    # linear_1 against the 128-lane padded W1 (lane-dense MXU tile) ...
    out = (jnp.dot(h.astype(w1_ref.dtype), w1_ref[...],
                   preferred_element_type=jnp.float32) + b1_ref[...])
    # ... but write back only the real output columns (cuts HBM writes ~8x).
    out_ref[...] = out[:, :out_ref.shape[1]].astype(out_ref.dtype)


def lin_fuse_forward(data, wf, bf, w0, b0, w1, b1, *, fuse_dim,
                     tile_b=None, compute_dtype=jnp.float32):
    """data: (B, input_dim). Weights are PyTorch-style (out_features, in_features)."""
    B, input_dim = data.shape
    hidden_dim = w0.shape[0]
    output_dim = w1.shape[0]

    # ---- host/XLA-side algebraic fold (tiny one-time GEMMs, f32) -----------
    wf_t = wf.T                                   # (input_dim, fuse_dim)
    w0_t = w0.T                                   # (fuse_dim + input_dim, hidden_dim)
    w0f_t = w0_t[:fuse_dim, :]                    # fuse columns of W0
    w0d_t = w0_t[fuse_dim:, :]                    # data columns of W0
    w_eff = wf_t @ w0f_t + w0d_t                  # (input_dim, hidden_dim)
    b_eff = (bf @ w0f_t + b0).reshape(1, -1)      # (1, hidden_dim), stays f32
    w1_t = w1.T                                   # (hidden_dim, output_dim)

    # ---- lane-dense W1/b1 for the MXU (the OUTPUT array itself is NOT padded)
    out_pad = _round_up(output_dim, 128)
    w1_p = jnp.pad(w1_t, ((0, 0), (0, out_pad - output_dim)))
    b1_p = jnp.pad(b1.reshape(1, -1), ((0, 0), (0, out_pad - output_dim)))

    # Optional reduced-precision read path; accumulation stays f32 in-kernel.
    data_k = data.astype(compute_dtype)
    w_eff_k = w_eff.astype(compute_dtype)
    w1_k = w1_p.astype(compute_dtype)

    # ---- batch tiling (generation-aware) ------------------------------------
    num_tc = _num_tensorcores()
    TILE_CAP = 4096            # ~8-9 MiB double-buffered @ f32 -> fits v5e/v6e/v7x
    if tile_b is None:
        b8 = _round_up(max(B, 1), 8)
        if num_tc >= 2:
            # Keep an even number (>= 2) of grid steps so both TensorCores work.
            n_steps = max(2, 2 * pl.cdiv(b8, 2 * TILE_CAP))
            tile_b = _round_up(pl.cdiv(B, n_steps), 8)
        else:
            # Single-TC chip: one big tile for small B, capped tiles otherwise.
            tile_b = min(b8, TILE_CAP)
    tile_b = max(8, _round_up(tile_b, 8))

    B_pad = _round_up(B, tile_b)
    data_p = jnp.pad(data_k, ((0, B_pad - B), (0, 0))) if B_pad != B else data_k
    grid = (B_pad // tile_b,)

    # ---- VMEM + cost bookkeeping --------------------------------------------
    d_bytes = jnp.dtype(compute_dtype).itemsize
    lane_in = _round_up(input_dim, 128)
    lane_out = _round_up(output_dim, 128)
    vmem_needed = (2 * tile_b * lane_in * d_bytes          # data tiles (double-buffered)
                   + 2 * tile_b * lane_out * 4             # out tiles (double-buffered)
                   + (w_eff_k.size + w1_k.size) * d_bytes  # resident weights
                   + (b_eff.size + b1_p.size) * 4)
    vmem_limit = int(min(max(int(vmem_needed * 1.5), 16 << 20), 48 << 20))

    cost = pl.CostEstimate(
        flops=int(2 * B_pad * (input_dim * hidden_dim + hidden_dim * out_pad)),
        transcendentals=0,
        bytes_accessed=int(B_pad * input_dim * d_bytes
                           + B_pad * output_dim * 4
                           + (w_eff_k.size + w1_k.size) * d_bytes
                           + (b_eff.size + b1_p.size) * 4),
    )

    out = pl.pallas_call(
        linfuse_kernel,
        out_shape=jax.ShapeDtypeStruct((B_pad, output_dim), jnp.float32),
        grid_spec=pl.GridSpec(
            grid=grid,
            in_specs=[
                pl.BlockSpec((tile_b, input_dim), lambda i: (i, 0)),   # data tile
                pl.BlockSpec(w_eff_k.shape, lambda i: (0, 0)),         # W_eff (resident)
                pl.BlockSpec(b_eff.shape, lambda i: (0, 0)),           # b_eff
                pl.BlockSpec(w1_k.shape, lambda i: (0, 0)),            # W1^T (128-padded)
                pl.BlockSpec(b1_p.shape, lambda i: (0, 0)),            # b1 (128-padded)
            ],
            out_specs=pl.BlockSpec((tile_b, output_dim), lambda i: (i, 0)),
        ),
        compiler_params=pltpu.CompilerParams(
            dimension_semantics=("parallel",),
            vmem_limit_bytes=vmem_limit),
        cost_estimate=cost,
    )(data_p, w_eff_k, b_eff, w1_k, b1_p)

    return out[:B, :]


def reference_forward(data, wf, bf, w0, b0, w1, b1):
    fuse = data @ wf.T + bf
    x = jnp.concatenate([fuse, data], axis=1)
    h = jnp.maximum(x @ w0.T + b0, 0.0)
    return h @ w1.T + b1


if __name__ == "__main__":
    # Module hyperparams (Config.both, n_layers=2, drop_out=0.0, hidden_dim=-1):
    #   input_dim=32, fuse_dim=32 -> concat input = 64, hidden_dim = 64, output_dim=16
    B = 16
    input_dim = 32
    fuse_dim = 32
    total_in = fuse_dim + input_dim      # 64
    hidden_dim = total_in                # hidden_dim == -1 -> total input dim
    output_dim = 16

    key = jax.random.PRNGKey(0)
    keys = jax.random.split(key, 8)
    data = jax.random.normal(keys[0], (B, input_dim), dtype=jnp.float32)

    # Deterministic synthetic parameters (PyTorch Linear layout: weight=(out,in))
    wf = jax.random.normal(keys[1], (fuse_dim, input_dim), jnp.float32) * 0.1
    bf = jax.random.normal(keys[2], (fuse_dim,), jnp.float32) * 0.1
    w0 = jax.random.normal(keys[3], (hidden_dim, total_in), jnp.float32) * 0.1
    b0 = jax.random.normal(keys[4], (hidden_dim,), jnp.float32) * 0.1
    w1 = jax.random.normal(keys[5], (output_dim, hidden_dim), jnp.float32) * 0.1
    b1 = jax.random.normal(keys[6], (output_dim,), jnp.float32) * 0.1

    ref = reference_forward(data, wf, bf, w0, b0, w1, b1)

    # Small batch: auto tile (1 step on v5e/v6e, 2 steps on v7x-class chips).
    out = lin_fuse_forward(data, wf, bf, w0, b0, w1, b1, fuse_dim=fuse_dim)
    out = jax.block_until_ready(out)
    assert out.shape == (B, output_dim)
    assert jnp.allclose(out, ref, atol=1e-4, rtol=1e-4)

    # Multi-step grid + batch padding path (explicit small tile for the test).
    B2 = 300
    data2 = jax.random.normal(keys[7], (B2, input_dim), dtype=jnp.float32)
    ref2 = reference_forward(data2, wf, bf, w0, b0, w1, b1)
    out2 = lin_fuse_forward(data2, wf, bf, w0, b0, w1, b1,
                            fuse_dim=fuse_dim, tile_b=128)
    out2 = jax.block_until_ready(out2)
    assert out2.shape == (B2, output_dim)
    assert jnp.allclose(out2, ref2, atol=1e-4, rtol=1e-4)

    print("KERNEL_OK")
</pallas_src>

<mosaic_0001>
module attributes {stable_mosaic.version = 11 : i64} {
  func.func @linfuse_kernel(%arg0: i32, %arg1: memref<16x32xf32, #tpu.memory_space<vmem>>, %arg2: memref<32x64xf32, #tpu.memory_space<vmem>>, %arg3: memref<1x64xf32, #tpu.memory_space<vmem>>, %arg4: memref<64x128xf32, #tpu.memory_space<vmem>>, %arg5: memref<1x128xf32, #tpu.memory_space<vmem>>, %arg6: memref<16x16xf32, #tpu.memory_space<vmem>>) attributes {dimension_semantics = [#tpu.dimension_semantics<parallel>], iteration_bounds = array<i64: 1>, scalar_prefetch = 0 : i64, scratch_operands = 0 : i64, tpu.core_type = #tpu.core_type<tc>, window_params = [{transform_indices = @transform_0, window_bounds = array<i64: 16, 32>}, {pipeline_mode = #tpu.pipeline_mode<synchronous>, transform_indices = @transform_1, window_bounds = array<i64: 32, 64>}, {pipeline_mode = #tpu.pipeline_mode<synchronous>, transform_indices = @transform_2, window_bounds = array<i64: 1, 64>}, {pipeline_mode = #tpu.pipeline_mode<synchronous>, transform_indices = @transform_3, window_bounds = array<i64: 64, 128>}, {pipeline_mode = #tpu.pipeline_mode<synchronous>, transform_indices = @transform_4, window_bounds = array<i64: 1, 128>}, {transform_indices = @transform_5, window_bounds = array<i64: 16, 16>}]} {
    %c0 = arith.constant 0 : index
    %c0_0 = arith.constant 0 : index
    %0 = vector.load %arg1[%c0, %c0_0] : memref<16x32xf32, #tpu.memory_space<vmem>>, vector<16x32xf32>
    %c0_1 = arith.constant 0 : index
    %c0_2 = arith.constant 0 : index
    %1 = vector.load %arg2[%c0_1, %c0_2] : memref<32x64xf32, #tpu.memory_space<vmem>>, vector<32x64xf32>
    %cst = arith.constant dense<0.000000e+00> : vector<16x64xf32>
    %2 = tpu.matmul %0, %1, %cst {dimension_numbers = #tpu.dot_dimension_numbers<[1], [0], [0], [1], [0, 0, 1, 1], [], []>} : vector<16x32xf32>, vector<32x64xf32>, vector<16x64xf32> -> vector<16x64xf32>
    %c0_3 = arith.constant 0 : index
    %c0_4 = arith.constant 0 : index
    %3 = vector.load %arg3[%c0_3, %c0_4] : memref<1x64xf32, #tpu.memory_space<vmem>>, vector<1x64xf32>
    %4 = vector.broadcast %3 : vector<1x64xf32> to vector<16x64xf32>
    %5 = arith.addf %2, %4 : vector<16x64xf32>
    %cst_5 = arith.constant 0.000000e+00 : f32
    %6 = vector.broadcast %cst_5 : f32 to vector<16x64xf32>
    %7 = arith.maximumf %5, %6 : vector<16x64xf32>
    %c0_6 = arith.constant 0 : index
    %c0_7 = arith.constant 0 : index
    %8 = vector.load %arg4[%c0_6, %c0_7] : memref<64x128xf32, #tpu.memory_space<vmem>>, vector<64x128xf32>
    %cst_8 = arith.constant dense<0.000000e+00> : vector<16x128xf32>
    %9 = tpu.matmul %7, %8, %cst_8 {dimension_numbers = #tpu.dot_dimension_numbers<[1], [0], [0], [1], [0, 0, 1, 1], [], []>} : vector<16x64xf32>, vector<64x128xf32>, vector<16x128xf32> -> vector<16x128xf32>
    %c0_9 = arith.constant 0 : index
    %c0_10 = arith.constant 0 : index
    %10 = vector.load %arg5[%c0_9, %c0_10] : memref<1x128xf32, #tpu.memory_space<vmem>>, vector<1x128xf32>
    %11 = vector.broadcast %10 : vector<1x128xf32> to vector<16x128xf32>
    %12 = arith.addf %9, %11 : vector<16x128xf32>
    %13 = vector.extract_strided_slice %12 {offsets = [0, 0], sizes = [16, 16], strides = [1, 1]} : vector<16x128xf32> to vector<16x16xf32>
    %c0_11 = arith.constant 0 : index
    %c0_12 = arith.constant 0 : index
    %14 = vector.load %arg6[%c0_11, %c0_12] : memref<16x16xf32, #tpu.memory_space<vmem>>, vector<16x16xf32>
    tpu.vector_store %arg6[%c0_11, %c0_12], %13 {strides = array<i32>} : memref<16x16xf32, #tpu.memory_space<vmem>>, vector<16x16xf32>,
    return
  }
  func.func @transform_0(%arg0: i32) -> (i32, i32) {
    %c0_i32 = arith.constant 0 : i32
    %c0_i32_0 = arith.constant 0 : i32
    return %arg0, %c0_i32 : i32, i32
  }
  func.func @transform_1(%arg0: i32) -> (i32, i32) {
    %c0_i32 = arith.constant 0 : i32
    %c0_i32_0 = arith.constant 0 : i32
    %c0_i32_1 = arith.constant 0 : i32
    return %c0_i32, %c0_i32_0 : i32, i32
  }
  func.func @transform_2(%arg0: i32) -> (i32, i32) {
    %c0_i32 = arith.constant 0 : i32
    %c0_i32_0 = arith.constant 0 : i32
    %c0_i32_1 = arith.constant 0 : i32
    return %c0_i32, %c0_i32_0 : i32, i32
  }
  func.func @transform_3(%arg0: i32) -> (i32, i32) {
    %c0_i32 = arith.constant 0 : i32
    %c0_i32_0 = arith.constant 0 : i32
    %c0_i32_1 = arith.constant 0 : i32
    return %c0_i32, %c0_i32_0 : i32, i32
  }
  func.func @transform_4(%arg0: i32) -> (i32, i32) {
    %c0_i32 = arith.constant 0 : i32
    %c0_i32_0 = arith.constant 0 : i32
    %c0_i32_1 = arith.constant 0 : i32
    return %c0_i32, %c0_i32_0 : i32, i32
  }
  func.func @transform_5(%arg0: i32) -> (i32, i32) {
    %c0_i32 = arith.constant 0 : i32
    %c0_i32_0 = arith.constant 0 : i32
    return %arg0, %c0_i32 : i32, i32
  }
}

</mosaic_0001>

<llo_original>
// kernel: tpu_custom_call.1
$region0: #{tpu_custom_call.1}
  #allocation0 [shape = 'u32[]', space=smem, size = 0x4, offset = 0x4, fixed_abs, tag = 'smem constant byte address 0x4 - core index']
  #allocation1 [shape = 'u32[144,128]{1,0:T(1,128)}', space=vmem, size = 0x12000, scoped, tag = 'internal scratch']
  %s0 = inlined_call_operand.hbm [shape: f32[16,32], index: 0, kind: input, shape index: {}]
  %s1 = inlined_call_operand.hbm [shape: f32[32,64], index: 1, kind: input, shape index: {}]
  %s2 = inlined_call_operand.vmem [shape: f32[1,64], index: 2, kind: input, shape index: {}]
  %s3 = inlined_call_operand.hbm [shape: f32[64,128], index: 3, kind: input, shape index: {}]
  %s4 = inlined_call_operand.vmem [shape: f32[1,128], index: 4, kind: input, shape index: {}]
  %s5 = inlined_call_operand.hbm [shape: f32[16,16], index: 5, kind: output, shape index: {}]
  %s6 = sld [smem:[#allocation0]]
  $region42: #{tpu_custom_call.1} parent=0
    _
  %s8 = ssub.s32 1, %s6
  %s9 = scalar_select 0, %s8, %s6
  $region1: #{tpu_custom_call.1} parent=0
    #allocation2 [shape = 'u8[8192]{0}', space=vmem, size = 0x2000, scoped, tag = 'input window, operand 0, single buffered']
    #allocation3 [shape = 's32[1]{0}', space=sflag, size = 0x4, scoped, tag = 'scoped memory for tpu_custom_call.1']
    #allocation4 [shape = 's32[1]{0}', space=sflag, size = 0x4, scoped, tag = 'scoped memory for tpu_custom_call.1']
    #allocation5 [shape = 'u8[16384]{0}', space=vmem, size = 0x4000, scoped, tag = 'input window, operand 1, single buffered']
    #allocation6 [shape = 's32[1]{0}', space=sflag, size = 0x4, scoped, tag = 'scoped memory for tpu_custom_call.1']
    #allocation7 [shape = 'u8[32768]{0}', space=vmem, size = 0x8000, scoped, tag = 'input window, operand 3, single buffered']
    #allocation8 [shape = 'u8[8192]{0}', space=vmem, size = 0x2000, scoped, tag = 'output window, operand 0, single buffered']
    %10 = vsyncpa [#allocation3], 0
    %11 = vsyncpa [#allocation6], 0
    %12 = vsyncpa [#allocation4], 0
    // Predicated region
    $region2: #{tpu_custom_call.1} parent=1 // pred_check
      _
    $region3: #{tpu_custom_call.1} parent=1 // pred_check_branch
      %14 = sbr.rel (0) target = $region5
    $region4: #{tpu_custom_call.1} parent=1 // pred_region
      %s16 = ssub.s32 256, 256
      %17 = vsyncadd [#allocation3], %s16
      %s18 = sshll.u32 [#allocation2], 4
      %s19 = int_to_ptr.vmem [resolvable:$true] %s18
      %24 = dma.hbm_to_vmem [thread:$0]  %s0, 256, %s19, [#allocation3], 128, 128, 8
    $region5: #{tpu_custom_call.1} parent=1 // pred_fallthru
      _
    // Predicated region
    $region6: #{tpu_custom_call.1} parent=1 // pred_check
      _
    $region7: #{tpu_custom_call.1} parent=1 // pred_check_branch
      %26 = sbr.rel (0) target = $region9
    $region8: #{tpu_custom_call.1} parent=1 // pred_region
      %s28 = ssub.s32 512, 512
      %29 = vsyncadd [#allocation6], %s28
      %s30 = sshll.u32 [#allocation5], 4
      %s31 = int_to_ptr.vmem [resolvable:$true] %s30
      %36 = dma.hbm_to_vmem [thread:$0]  %s1, 512, %s31, [#allocation6], 128, 128, 8
    $region9: #{tpu_custom_call.1} parent=1 // pred_fallthru
      _
    // Predicated region
    $region10: #{tpu_custom_call.1} parent=1 // pred_check
      _
    $region11: #{tpu_custom_call.1} parent=1 // pred_check_branch
      %38 = sbr.rel (0) target = $region13
    $region12: #{tpu_custom_call.1} parent=1 // pred_region
      _
    $region13: #{tpu_custom_call.1} parent=1 // pred_fallthru
      _
    // Predicated region
    $region14: #{tpu_custom_call.1} parent=1 // pred_check
      _
    $region15: #{tpu_custom_call.1} parent=1 // pred_check_branch
      %40 = sbr.rel (0) target = $region17
    $region16: #{tpu_custom_call.1} parent=1 // pred_region
      %s42 = ssub.s32 1024, 1024
      %43 = vsyncadd [#allocation6], %s42
      %s44 = sshll.u32 [#allocation7], 4
      %s45 = int_to_ptr.vmem [resolvable:$true] %s44
      %50 = dma.hbm_to_vmem [thread:$0]  %s3, 1024, %s45, [#allocation6], 128, 128, 8
    $region17: #{tpu_custom_call.1} parent=1 // pred_fallthru
      _
    // Predicated region
    $region18: #{tpu_custom_call.1} parent=1 // pred_check
      _
    $region19: #{tpu_custom_call.1} parent=1 // pred_check_branch
      %52 = sbr.rel (0) target = $region21
    $region20: #{tpu_custom_call.1} parent=1 // pred_region
      _
    $region21: #{tpu_custom_call.1} parent=1 // pred_fallthru
      _
    // Predicated region
    $region22: #{tpu_custom_call.1} parent=1 // pred_check
      _
    $region23: #{tpu_custom_call.1} parent=1 // pred_check_branch
      %54 = sbr.rel (0) target = $region25
    $region24: #{tpu_custom_call.1} parent=1 // pred_region
      %55 = dma.done [#allocation3], 256
    $region25: #{tpu_custom_call.1} parent=1 // pred_fallthru
      _
    // Predicated region
    $region26: #{tpu_custom_call.1} parent=1 // pred_check
      _
    $region27: #{tpu_custom_call.1} parent=1 // pred_check_branch
      %57 = sbr.rel (0) target = $region29
    $region28: #{tpu_custom_call.1} parent=1 // pred_region
      %58 = dma.done [#allocation6], 512
    $region29: #{tpu_custom_call.1} parent=1 // pred_fallthru
      _
    // Predicated region
    $region30: #{tpu_custom_call.1} parent=1 // pred_check
      _
    $region31: #{tpu_custom_call.1} parent=1 // pred_check_branch
      %60 = sbr.rel (0) target = $region33
    $region32: #{tpu_custom_call.1} parent=1 // pred_region
      %61 = dma.done [#allocation6], 1024
    $region33: #{tpu_custom_call.1} parent=1 // pred_fallthru
      _
    %v62 = vld [vmem:[#allocation2] sm:$0xff]
    %v63 = vld [vmem:[#allocation2 + $0x8] sm:$0xff]
    %v64 = vld [vmem:[#allocation5] sm:$0xff]
    %v65 = vld [vmem:[#allocation5 + $0x8] sm:$0xff]
    %v66 = vld [vmem:[#allocation5 + $0x10] sm:$0xff]
    %v67 = vld [vmem:[#allocation5 + $0x18] sm:$0xff]
    %v68 = vld [vmem:[%s2] sm:$0x1]
    %v70 = vlaneseq
    %v71 = vshrl.u32 %v70, 7
    %v72 = vsub.s32 0, %v71
    %v73 = vrot.slane %v68, %v72
    %vm75 = vcmask 261120
    %v77 = vsel %vm75, %v62, 0
    %v80 = vsel %vm75, %v63, 0
    %82 = vmatprep.subr.mxu0 0.0
    %83 = vmatpush1.msra.mxu0 0.0
    %84 = vmatprep.subr.mxu0 0.0
    %85 = vmatpush1.msra.mxu0 0.0
    %86 = vmatprep.subr.mxu0 0.0
    %87 = vmatpush1.msra.mxu0 0.0
    %88 = vmatprep.subr.mxu0 0.0
    %89 = vmatpush1.msra.mxu0 0.0
    %90 = vmatprep.subr.mxu0 0.0
    %91 = vmatpush1.msra.mxu0 0.0
    %92 = vmatprep.subr.mxu0 0.0
    %93 = vmatpush1.msra.mxu0 0.0
    %94 = vmatprep.subr.mxu0 0.0
    %95 = vmatpush1.msra.mxu0 0.0
    %96 = vmatprep.subr.mxu0 0.0
    %97 = vmatpush1.msra.mxu0 0.0
    %98 = vmatprep.subr.mxu0 0.0
    %99 = vmatpush1.msra.mxu0 0.0
    %100 = vmatprep.subr.mxu0 0.0
    %101 = vmatpush1.msra.mxu0 0.0
    %102 = vmatprep.subr.mxu0 0.0
    %103 = vmatpush1.msra.mxu0 0.0
    %104 = vmatprep.subr.mxu0 0.0
    %105 = vmatpush1.msra.mxu0 0.0
    %106 = vmatprep.subr.mxu0 0.0
    %107 = vmatpush1.msra.mxu0 %v67
    %108 = vmatprep.subr.mxu0 0.0
    %109 = vmatpush1.msra.mxu0 %v66
    %110 = vmatprep.subr.mxu0 0.0
    %111 = vmatpush1.msra.mxu0 %v65
    %112 = vmatprep.subr.mxu0 0.0
    %113 = vmatpush1.msra.mxu0 %v64
    %114 = vmatprep.subr.mxu0 0.0
    %115 = vmatpush2.msra.mxu0 0.0
    %116 = vmatprep.subr.mxu0 0.0
    %117 = vmatpush2.msra.mxu0 0.0
    %118 = vmatprep.subr.mxu0 0.0
    %119 = vmatpush2.msra.mxu0 0.0
    %120 = vmatprep.subr.mxu0 0.0
    %121 = vmatpush2.msra.mxu0 0.0
    %122 = vmatprep.subr.mxu0 0.0
    %123 = vmatpush2.msra.mxu0 0.0
    %124 = vmatprep.subr.mxu0 0.0
    %125 = vmatpush2.msra.mxu0 0.0
    %126 = vmatprep.subr.mxu0 0.0
    %127 = vmatpush2.msra.mxu0 0.0
    %128 = vmatprep.subr.mxu0 0.0
    %129 = vmatpush2.msra.mxu0 0.0
    %130 = vmatprep.subr.mxu0 0.0
    %131 = vmatpush2.msra.mxu0 0.0
    %132 = vmatprep.subr.mxu0 0.0
    %133 = vmatpush2.msra.mxu0 0.0
    %134 = vmatprep.subr.mxu0 0.0
    %135 = vmatpush2.msra.mxu0 0.0
    %136 = vmatprep.subr.mxu0 0.0
    %137 = vmatpush2.msra.mxu0 0.0
    %138 = vmatprep.subr.mxu0 0.0
    %139 = vmatpush2.msra.mxu0 0.0
    %140 = vmatprep.subr.mxu0 0.0
    %141 = vmatpush2.msra.mxu0 0.0
    %142 = vmatprep.subr.mxu0 0.0
    %143 = vmatpush2.msra.mxu0 0.0
    %144 = vmatprep.subr.mxu0 0.0
    %145 = vmatpush2.msra.mxu0 0.0
    %146 = vmatprep.mubr.f32.mxu0 0.0
    %147 = vmatmul.mubr.f32.gmra.mxu0 %v77
    %v148 = vpop.f32.mrf.mxu0
    %v149 = vadd.f32 %v73, %v148
    %v150 = vpop.f32.mrf.mxu0
    %151 = vmatprep.mubr.f32.mxu0 0.0
    %152 = vmatmul.mubr.f32.gmra.mxu0 %v80
    %v153 = vpop.f32.mrf.mxu0
    %v154 = vadd.f32 %v73, %v153
    %v155 = vpop.f32.mrf.mxu0
    %156 = vdwg.mxu0
    %v157 = vmax.f32 %v149, 0.0
    %v158 = vmax.f32 %v154, 0.0
    %v159 = vld [vmem:[#allocation7] sm:$0xff]
    %v160 = vld [vmem:[#allocation7 + $0x8] sm:$0xff]
    %v161 = vld [vmem:[#allocation7 + $0x10] sm:$0xff]
    %v162 = vld [vmem:[#allocation7 + $0x18] sm:$0xff]
    %v163 = vld [vmem:[#allocation7 + $0x20] sm:$0xff]
    %v164 = vld [vmem:[#allocation7 + $0x28] sm:$0xff]
    %v165 = vld [vmem:[#allocation7 + $0x30] sm:$0xff]
    %v166 = vld [vmem:[#allocation7 + $0x38] sm:$0xff]
    %v167 = vld [vmem:[%s4] sm:$0x1]
    %v169 = vlaneseq
    %v170 = vshrl.u32 %v169, 7
    %v171 = vsub.s32 0, %v170
    %v172 = vrot.slane %v167, %v171
    %vm174 = vcmask 523264
    %v176 = vsel %vm174, %v157, 0
    %v179 = vsel %vm174, %v158, 0
    %181 = vmatprep.subr.mxu0 0.0
    %182 = vmatpush1.msra.mxu0 0.0
    %183 = vmatprep.subr.mxu0 0.0
    %184 = vmatpush1.msra.mxu0 0.0
    %185 = vmatprep.subr.mxu0 0.0
    %186 = vmatpush1.msra.mxu0 0.0
    %187 = vmatprep.subr.mxu0 0.0
    %188 = vmatpush1.msra.mxu0 0.0
    %189 = vmatprep.subr.mxu0 0.0
    %190 = vmatpush1.msra.mxu0 0.0
    %191 = vmatprep.subr.mxu0 0.0
    %192 = vmatpush1.msra.mxu0 0.0
    %193 = vmatprep.subr.mxu0 0.0
    %194 = vmatpush1.msra.mxu0 0.0
    %195 = vmatprep.subr.mxu0 0.0
    %196 = vmatpush1.msra.mxu0 0.0
    %197 = vmatprep.subr.mxu0 0.0
    %198 = vmatpush1.msra.mxu0 %v166
    %199 = vmatprep.subr.mxu0 0.0
    %200 = vmatpush1.msra.mxu0 %v165
    %201 = vmatprep.subr.mxu0 0.0
    %202 = vmatpush1.msra.mxu0 %v164
    %203 = vmatprep.subr.mxu0 0.0
    %204 = vmatpush1.msra.mxu0 %v163
    %205 = vmatprep.subr.mxu0 0.0
    %206 = vmatpush1.msra.mxu0 %v162
    %207 = vmatprep.subr.mxu0 0.0
    %208 = vmatpush1.msra.mxu0 %v161
    %209 = vmatprep.subr.mxu0 0.0
    %210 = vmatpush1.msra.mxu0 %v160
    %211 = vmatprep.subr.mxu0 0.0
    %212 = vmatpush1.msra.mxu0 %v159
    %213 = vmatprep.subr.mxu0 0.0
    %214 = vmatpush2.msra.mxu0 0.0
    %215 = vmatprep.subr.mxu0 0.0
    %216 = vmatpush2.msra.mxu0 0.0
    %217 = vmatprep.subr.mxu0 0.0
    %218 = vmatpush2.msra.mxu0 0.0
    %219 = vmatprep.subr.mxu0 0.0
    %220 = vmatpush2.msra.mxu0 0.0
    %221 = vmatprep.subr.mxu0 0.0
    %222 = vmatpush2.msra.mxu0 0.0
    %223 = vmatprep.subr.mxu0 0.0
    %224 = vmatpush2.msra.mxu0 0.0
    %225 = vmatprep.subr.mxu0 0.0
    %226 = vmatpush2.msra.mxu0 0.0
    %227 = vmatprep.subr.mxu0 0.0
    %228 = vmatpush2.msra.mxu0 0.0
    %229 = vmatprep.subr.mxu0 0.0
    %230 = vmatpush2.msra.mxu0 0.0
    %231 = vmatprep.subr.mxu0 0.0
    %232 = vmatpush2.msra.mxu0 0.0
    %233 = vmatprep.subr.mxu0 0.0
    %234 = vmatpush2.msra.mxu0 0.0
    %235 = vmatprep.subr.mxu0 0.0
    %236 = vmatpush2.msra.mxu0 0.0
    %237 = vmatprep.subr.mxu0 0.0
    %238 = vmatpush2.msra.mxu0 0.0
    %239 = vmatprep.subr.mxu0 0.0
    %240 = vmatpush2.msra.mxu0 0.0
    %241 = vmatprep.subr.mxu0 0.0
    %242 = vmatpush2.msra.mxu0 0.0
    %243 = vmatprep.subr.mxu0 0.0
    %244 = vmatpush2.msra.mxu0 0.0
    %245 = vmatprep.mubr.f32.mxu0 0.0
    %246 = vmatmul.mubr.f32.gmra.mxu0 %v176
    %v247 = vpop.f32.mrf.mxu0
    %v248 = vadd.f32 %v172, %v247
    %v249 = vpop.f32.mrf.mxu0
    %250 = vmatprep.mubr.f32.mxu0 0.0
    %251 = vmatmul.mubr.f32.gmra.mxu0 %v179
    %v252 = vpop.f32.mrf.mxu0
    %v253 = vadd.f32 %v172, %v252
    %v254 = vpop.f32.mrf.mxu0
    %255 = vdwg.mxu0
    %vm256 = vcmask 130048
    %257 = vst.msk [vmem:[#allocation8] sm:$0xff] %vm256, %v248
    %258 = vst.msk [vmem:[#allocation8 + $0x8] sm:$0xff] %vm256, %v253
    // Predicated region
    $region34: #{tpu_custom_call.1} parent=1 // pred_check
      _
    $region35: #{tpu_custom_call.1} parent=1 // pred_check_branch
      %260 = sbr.rel (0) target = $region37
    $region36: #{tpu_custom_call.1} parent=1 // pred_region
      %s262 = ssub.s32 256, 256
      %263 = vsyncadd [#allocation4], %s262
      %s264 = sshll.u32 [#allocation8], 4
      %s265 = int_to_ptr.vmem [resolvable:$true] %s264
      %270 = dma.vmem_to_hbm [thread:$0]  %s265, 256, %s5, [#allocation4], 128, 128, 8
    $region37: #{tpu_custom_call.1} parent=1 // pred_fallthru
      _
    // Predicated region
    $region38: #{tpu_custom_call.1} parent=1 // pred_check
      _
    $region39: #{tpu_custom_call.1} parent=1 // pred_check_branch
      %272 = sbr.rel (0) target = $region41
    $region40: #{tpu_custom_call.1} parent=1 // pred_region
      %273 = dma.done [#allocation4], 256
    $region41: #{tpu_custom_call.1} parent=1 // pred_fallthru
      _
    %274 = vsyncpa [#allocation3], 1
    %275 = vsyncpa [#allocation6], 1
    %276 = vsyncpa [#allocation4], 1

</llo_original>
